<compile_context>
chip_gen: v7x
topology: tpu7x:2x2x1
jax: 0.10.0
libtpu: 0.0.40
codegen_flags: <defaults>
</compile_context>

<pallas_src>
import functools
import math

import jax
import jax.numpy as jnp
from jax.experimental import pallas as pl
from jax.experimental.pallas import tpu as pltpu


def _bessel_basis_kernel(xT_ref, freqs_ref, out_ref, *, n_valid, tile):
    D = xT_ref.shape[0]                                    # static (3 for PaiNN edge vectors)

    # Row-wise squared norm as pure elementwise VPU FMAs along the lane axis.
    x0 = xT_ref[0:1, :]                                    # [1, TN]
    s = x0 * x0
    for d in range(1, D):                                  # static unroll over D
        xd = xT_ref[d:d + 1, :]
        s = s + xd * xd                                    # [1, TN]

    # Ragged-N guard: lanes beyond the real N in the last block hold undefined VMEM
    # data; force them to a benign value so sqrt/rsqrt/sin stay finite.  Those output
    # lanes are clipped by the (partial) output store anyway.
    lane_idx = jax.lax.broadcasted_iota(jnp.int32, s.shape, 1)
    gidx = pl.program_id(0) * tile + lane_idx
    s = jnp.where(gidx < n_valid, s, jnp.float32(1.0))

    # Exact sqrt for |x| (torch.norm parity); rsqrt (EUP slot) only for the 1/|x| factor.
    # Zero-protection matches torch.where(inputs == 0, 1.0, inputs): inv=1, sin(0)*1 = 0.
    r = jnp.sqrt(s)                                        # [1, TN]
    inv = jnp.where(s == 0.0, jnp.float32(1.0), jax.lax.rsqrt(s))

    # Lane-dense outer product + sin + scale: [R, 1] * [1, TN] -> [R, TN] (VPU, not MXU).
    ax = freqs_ref[...] * r
    out_ref[...] = (jnp.sin(ax) * inv).astype(out_ref.dtype)
    # TODO(synk): if a bundle dump on v6e/v7x shows VALU saturated by the sin polynomial,
    # try the sin(k*theta) angle-addition recurrence (freqs = k*pi/cutoff) per the review.


def bessel_basis_rn(x, freqs, *, tile_n=32768, out_dtype=jnp.float32):
    """Core kernel: x [N, D], freqs [R] -> yT [R, N] (lane-dense layout, no transpose).

    yT[k, n] = sin(|x_n| * freqs[k]) / (|x_n| if |x_n| != 0 else 1).
    Consumers that can take the transposed layout (e.g. a following Dense as W @ yT)
    should use this directly and skip the [N, R] transpose in `bessel_basis`.
    """
    N, D = x.shape
    R = freqs.shape[0]

    x32 = x.astype(jnp.float32)
    freqs_col = freqs.astype(jnp.float32).reshape(R, 1)

    lane = 128
    tile_req = max(lane, (int(tile_n) // lane) * lane)

    # Pick the number of grid steps: at least 2 (both v7x TensorCores get work, pipeline
    # has overlap) and rounded up to even; then a 128-aligned tile that covers N in that
    # many steps, capped at tile_req.  No padding of N is performed anywhere.
    steps = max(2, -(-N // tile_req))
    steps += steps % 2
    tile = min(tile_req, max(lane, ((-(-N // steps) + lane - 1) // lane) * lane))
    grid_n = -(-N // tile)

    # Wrapper-side layout plumbing: transposed input [D, N] (N on the lane axis).
    xT = jnp.transpose(x32)

    yT = pl.pallas_call(
        functools.partial(_bessel_basis_kernel, n_valid=N, tile=tile),
        out_shape=jax.ShapeDtypeStruct((R, N), out_dtype),
        grid_spec=pltpu.PrefetchScalarGridSpec(
            num_scalar_prefetch=0,
            grid=(grid_n,),
            in_specs=[
                pl.BlockSpec((D, tile), lambda i: (0, i)),   # x tile, N on lanes (ragged last)
                pl.BlockSpec((R, 1), lambda i: (0, 0)),      # freqs column, replicated
            ],
            out_specs=pl.BlockSpec((R, tile), lambda i: (0, i)),
        ),
        compiler_params=pltpu.CompilerParams(
            dimension_semantics=("parallel",),               # independent N tiles
            vmem_limit_bytes=32 * 1024 * 1024,               # headroom for big tiles on v5e
        ),
        cost_estimate=pl.CostEstimate(
            flops=(2 * D + 2) * N + 2 * R * N,               # norm + outer + scale
            transcendentals=R * N + 2 * N,                   # sin + sqrt + rsqrt
            bytes_accessed=4 * (D * N + R * N + R),          # x read + y write + freqs
        ),
    )(xT, freqs_col)
    return yT


def bessel_basis(x, freqs, **kwargs):
    """Module-parity wrapper: returns [N, R] like BesselBasis.forward.

    The final .T is the only remaining extra HBM pass (review option (b)): consumers
    that accept the [R, N] layout should call bessel_basis_rn directly and avoid it.
    """
    return bessel_basis_rn(x, freqs, **kwargs).T


if __name__ == "__main__":
    cutoff = 5.0
    num_radial = 16
    N, D = 200, 3   # deliberately NOT a multiple of 128 to exercise the ragged last block

    # Deterministic buffer init, matching the module __init__:
    # freqs = arange(1, num_radial + 1) * pi / cutoff
    freqs = jnp.arange(1, num_radial + 1, dtype=jnp.float32) * (math.pi / cutoff)

    key = jax.random.PRNGKey(0)
    x = jax.random.normal(key, (N, D), dtype=jnp.float32)
    # Include an exactly-zero row to exercise the torch.where zero-protection branch.
    x = x.at[0].set(jnp.zeros((D,), dtype=jnp.float32))

    y = bessel_basis(x, freqs)
    y = jax.block_until_ready(y)

    # Pure-JAX reference with the exact PyTorch-forward semantics.
    r = jnp.linalg.norm(x, axis=1)
    ax = r[:, None] * freqs[None, :]
    norm = jnp.where(r == 0.0, 1.0, r)
    y_ref = jnp.sin(ax) / norm[:, None]

    assert y.shape == (N, num_radial)
    assert jnp.allclose(y, y_ref, atol=5e-5, rtol=5e-5), float(jnp.max(jnp.abs(y - y_ref)))

    print("KERNEL_OK")
</pallas_src>

<mosaic_0001>
module attributes {stable_mosaic.version = 11 : i64} {
  func.func @_bessel_basis_kernel(%arg0: i32, %arg1: memref<3x128xf32, #tpu.memory_space<vmem>>, %arg2: memref<16x1xf32, #tpu.memory_space<vmem>>, %arg3: memref<16x128xf32, #tpu.memory_space<vmem>>) attributes {dimension_semantics = [#tpu.dimension_semantics<parallel>], iteration_bounds = array<i64: 2>, scalar_prefetch = 0 : i64, scratch_operands = 0 : i64, tpu.core_type = #tpu.core_type<tc>, window_params = [{transform_indices = @transform_0, window_bounds = array<i64: 3, 128>}, {pipeline_mode = #tpu.pipeline_mode<synchronous>, transform_indices = @transform_1, window_bounds = array<i64: 16, 1>}, {transform_indices = @transform_2, window_bounds = array<i64: 16, 128>}]} {
    %c0 = arith.constant 0 : index
    %c0_0 = arith.constant 0 : index
    %0 = vector.load %arg1[%c0, %c0_0] : memref<3x128xf32, #tpu.memory_space<vmem>>, vector<1x128xf32>
    %1 = arith.mulf %0, %0 : vector<1x128xf32>
    %c1 = arith.constant 1 : index
    %c0_1 = arith.constant 0 : index
    %2 = vector.load %arg1[%c1, %c0_1] : memref<3x128xf32, #tpu.memory_space<vmem>>, vector<1x128xf32>
    %3 = arith.mulf %2, %2 : vector<1x128xf32>
    %4 = arith.addf %1, %3 : vector<1x128xf32>
    %c2 = arith.constant 2 : index
    %c0_2 = arith.constant 0 : index
    %5 = vector.load %arg1[%c2, %c0_2] : memref<3x128xf32, #tpu.memory_space<vmem>>, vector<1x128xf32>
    %6 = arith.mulf %5, %5 : vector<1x128xf32>
    %7 = arith.addf %4, %6 : vector<1x128xf32>
    %8 = tpu.iota {dimensions = array<i32: 1>} : vector<1x128xi32>
    %c128_i32 = arith.constant 128 : i32
    %9 = arith.muli %arg0, %c128_i32 : i32
    %10 = vector.broadcast %9 : i32 to vector<1x128xi32>
    %11 = arith.addi %10, %8 : vector<1x128xi32>
    %c200_i32 = arith.constant 200 : i32
    %12 = vector.broadcast %c200_i32 : i32 to vector<1x128xi32>
    %13 = arith.cmpi slt, %11, %12 : vector<1x128xi32>
    %cst = arith.constant 1.000000e+00 : f32
    %14 = vector.broadcast %cst : f32 to vector<1x128xf32>
    %15 = arith.select %13, %7, %14 : vector<1x128xi1>, vector<1x128xf32>
    %16 = math.sqrt %15 : vector<1x128xf32>
    %cst_3 = arith.constant 0.000000e+00 : f32
    %17 = vector.broadcast %cst_3 : f32 to vector<1x128xf32>
    %18 = arith.cmpf oeq, %15, %17 : vector<1x128xf32>
    %19 = math.rsqrt %15 : vector<1x128xf32>
    %cst_4 = arith.constant 1.000000e+00 : f32
    %20 = vector.broadcast %cst_4 : f32 to vector<1x128xf32>
    %21 = arith.select %18, %20, %19 : vector<1x128xi1>, vector<1x128xf32>
    %c0_5 = arith.constant 0 : index
    %c0_6 = arith.constant 0 : index
    %22 = vector.load %arg2[%c0_5, %c0_6] : memref<16x1xf32, #tpu.memory_space<vmem>>, vector<16x1xf32>
    %23 = vector.broadcast %22 : vector<16x1xf32> to vector<16x128xf32>
    %24 = vector.broadcast %16 : vector<1x128xf32> to vector<16x128xf32>
    %25 = arith.mulf %23, %24 : vector<16x128xf32>
    %26 = math.sin %25 : vector<16x128xf32>
    %27 = vector.broadcast %21 : vector<1x128xf32> to vector<16x128xf32>
    %28 = arith.mulf %26, %27 : vector<16x128xf32>
    %c0_7 = arith.constant 0 : index
    %c0_8 = arith.constant 0 : index
    %29 = vector.load %arg3[%c0_7, %c0_8] : memref<16x128xf32, #tpu.memory_space<vmem>>, vector<16x128xf32>
    tpu.vector_store %arg3[%c0_7, %c0_8], %28 {strides = array<i32>} : memref<16x128xf32, #tpu.memory_space<vmem>>, vector<16x128xf32>,
    return
  }
  func.func @transform_0(%arg0: i32) -> (i32, i32) {
    %c0_i32 = arith.constant 0 : i32
    %c0_i32_0 = arith.constant 0 : i32
    return %c0_i32, %arg0 : i32, i32
  }
  func.func @transform_1(%arg0: i32) -> (i32, i32) {
    %c0_i32 = arith.constant 0 : i32
    %c0_i32_0 = arith.constant 0 : i32
    %c0_i32_1 = arith.constant 0 : i32
    return %c0_i32, %c0_i32_0 : i32, i32
  }
  func.func @transform_2(%arg0: i32) -> (i32, i32) {
    %c0_i32 = arith.constant 0 : i32
    %c0_i32_0 = arith.constant 0 : i32
    return %c0_i32, %arg0 : i32, i32
  }
}

</mosaic_0001>

<llo_original>
// kernel: tpu_custom_call.1
$region0: #{tpu_custom_call.1}
  #allocation0 [shape = 'u32[]', space=smem, size = 0x4, offset = 0x4, fixed_abs, tag = 'smem constant byte address 0x4 - core index']
  #allocation1 [shape = 'u32[144,128]{1,0:T(1,128)}', space=vmem, size = 0x12000, scoped, tag = 'internal scratch']
  %s0 = inlined_call_operand.vmem [shape: f32[3,200], index: 0, kind: input, shape index: {}]
  %s1 = inlined_call_operand.vmem [shape: f32[16,1], index: 1, kind: input, shape index: {}]
  %s2 = inlined_call_operand.hbm [shape: f32[16,200], index: 2, kind: output, shape index: {}]
  %s3 = sld [smem:[#allocation0]]
  $region41: #{tpu_custom_call.1} parent=0
    _
  %s5 = ssub.s32 1, %s3
  %s6 = scalar_select 0, %s5, %s3
  $region1: #{tpu_custom_call.1} parent=0
    #allocation2 [shape = 'u8[16384]{0}', space=vmem, size = 0x4000, scoped, tag = 'output window, operand 0']
    #allocation3 [shape = 's32[2]{0}', space=sflag, size = 0x8, scoped, tag = 'scoped memory for tpu_custom_call.1']
    %7 = vsyncpa [#allocation3], 0
    %s8 = scalar_lea.sflag [#allocation3], 1
    %9 = vsyncpa %s8, 0
    loop: start=0, step=1, limit=4
    $region2: #{tpu_custom_call.1} parent=1 // loop_pre_header
      _
    $region3: #{tpu_custom_call.1} parent=1 // loop_header
      %s11 = sphi 0, %s15
      %p12 = scmp.ge.s32.totalorder %s11, 4
      %s21 = sphi 0, %s23
      %s24 = sphi 0, %s21
      %s25 = sphi 0, %s24
      %s41 = sphi 0, %s25
      %s45 = sphi 0, %s45
      %s47 = sphi 0, %s45
      %s48 = sphi 0, %s47
      %s62 = sphi 0, %s48
      %s68 = sphi 0, %s70
      %s71 = sphi 0, %s68
      %s72 = sphi 0, %s71
      %s88 = sphi 0, %s72
    $region4: #{tpu_custom_call.1} parent=1 // loop_header_branch
      %14 = sbr.rel (%p12) target = $region8
    $region5: #{tpu_custom_call.1} parent=1 // loop_body
      %s16 = ssub.s32 %s11, 1
      %s17 = ssub.s32 %s11, 2
      %s18 = sadd.s32 %s11, 1
      %s19 = ssub.s32 %s11, %s18
      %p20 = scmp.eq.s32.totalorder %s19, 0
      %s22 = sadd.s32 %s21, 1
      %s23 = scalar_select %p20, %s21, %s22
      %p26 = pneg %p20
      %p27 = scmp.eq.s32.totalorder %s11, 1
      %p28 = por %p26, %p27
      %p29 = scmp.ne.s32.totalorder %s21, %s24
      %p30 = scmp.eq.s32.totalorder %s11, 0
      %p31 = por %p29, %p30
      %p32 = scmp.ne.s32.totalorder %s21, %s24
      %p33 = scmp.eq.s32.totalorder %s16, 1
      %p34 = por %p32, %p33
      %p35 = scmp.ne.s32.totalorder %s24, %s25
      %p36 = scmp.eq.s32.totalorder %s16, 0
      %p37 = por %p35, %p36
      %p38 = scmp.ne.s32.totalorder %s24, %s25
      %p39 = scmp.eq.s32.totalorder %s17, 1
      %p40 = por %p38, %p39
      %p42 = scmp.ne.s32.totalorder %s25, %s41
      %p43 = scmp.eq.s32.totalorder %s17, 0
      %p44 = por %p42, %p43
      %s46 = sadd.s32 %s45, 1
      %p49 = scmp.eq.s32.totalorder %s11, 1
      %p50 = scmp.ne.s32.totalorder %s45, %s47
      %p51 = scmp.eq.s32.totalorder %s11, 0
      %p52 = por %p50, %p51
      %p53 = scmp.ne.s32.totalorder %s45, %s47
      %p54 = scmp.eq.s32.totalorder %s16, 1
      %p55 = por %p53, %p54
      %p56 = scmp.ne.s32.totalorder %s47, %s48
      %p57 = scmp.eq.s32.totalorder %s16, 0
      %p58 = por %p56, %p57
      %p59 = scmp.ne.s32.totalorder %s47, %s48
      %p60 = scmp.eq.s32.totalorder %s17, 1
      %p61 = por %p59, %p60
      %p63 = scmp.ne.s32.totalorder %s48, %s62
      %p64 = scmp.eq.s32.totalorder %s17, 0
      %p65 = por %p63, %p64
      %s66 = ssub.s32 %s11, %s18
      %p67 = scmp.eq.s32.totalorder %s66, 0
      %s69 = sadd.s32 %s68, 1
      %s70 = scalar_select %p67, %s68, %s69
      %p73 = pneg %p67
      %p74 = scmp.eq.s32.totalorder %s11, 1
      %p75 = por %p73, %p74
      %p76 = scmp.ne.s32.totalorder %s68, %s71
      %p77 = scmp.eq.s32.totalorder %s11, 0
      %p78 = por %p76, %p77
      %p79 = scmp.ne.s32.totalorder %s68, %s71
      %p80 = scmp.eq.s32.totalorder %s16, 1
      %p81 = por %p79, %p80
      %p82 = scmp.ne.s32.totalorder %s71, %s72
      %p83 = scmp.eq.s32.totalorder %s16, 0
      %p84 = por %p82, %p83
      %p85 = scmp.ne.s32.totalorder %s71, %s72
      %p86 = scmp.eq.s32.totalorder %s17, 1
      %p87 = por %p85, %p86
      %p89 = scmp.ne.s32.totalorder %s72, %s88
      %p90 = scmp.eq.s32.totalorder %s17, 0
      %p91 = por %p89, %p90
      %p92 = scmp.le.s32.totalorder 1, %s11
      %p93 = scmp.lt.s32.totalorder %s11, 3
      %p94 = pnand %p92, %p93
      %p95 = pneg %p94
      // Predicated region
      $region9: #{tpu_custom_call.1} parent=5 // pred_check
        _
      $region10: #{tpu_custom_call.1} parent=5 // pred_check_branch
        %97 = sbr.rel (%p94) target = $region12
      $region11: #{tpu_custom_call.1} parent=5 // pred_region
        %s98 = ssub.s32 %s11, 1
        // Predicated region
        $region13: #{tpu_custom_call.1} parent=11 // pred_check
          %p99 = pneg %p58
        $region14: #{tpu_custom_call.1} parent=11 // pred_check_branch
          %101 = sbr.rel (%p99) target = $region16
        $region15: #{tpu_custom_call.1} parent=11 // pred_region
          _
        $region16: #{tpu_custom_call.1} parent=11 // pred_fallthru
          _
      $region12: #{tpu_custom_call.1} parent=5 // pred_fallthru
        _
      %p102 = scmp.lt.s32.totalorder %s11, 2
      // Predicated region
      $region17: #{tpu_custom_call.1} parent=5 // pred_check
        %p103 = pneg %p102
      $region18: #{tpu_custom_call.1} parent=5 // pred_check_branch
        %105 = sbr.rel (%p103) target = $region20
      $region19: #{tpu_custom_call.1} parent=5 // pred_region
        // Predicated region
        $region21: #{tpu_custom_call.1} parent=19 // pred_check
          %p106 = pneg %p31
        $region22: #{tpu_custom_call.1} parent=19 // pred_check_branch
          %108 = sbr.rel (%p106) target = $region24
        $region23: #{tpu_custom_call.1} parent=19 // pred_region
          %p109 = scmp.lt.s32.totalorder %s11, 1
          %s110 = scalar_select %p109, %s11, 1
          %s111 = smul.addr %s110, 4
          %s112 = scalar_lea.vmem %s0, %s111
        $region24: #{tpu_custom_call.1} parent=19 // pred_fallthru
          _
      $region20: #{tpu_custom_call.1} parent=5 // pred_fallthru
        _
      %p113 = scmp.le.s32.totalorder 1, %s11
      %p114 = scmp.lt.s32.totalorder %s11, 3
      %p115 = pnand %p113, %p114
      %p116 = pneg %p115
      // Predicated region
      $region25: #{tpu_custom_call.1} parent=5 // pred_check
        _
      $region26: #{tpu_custom_call.1} parent=5 // pred_check_branch
        %118 = sbr.rel (%p115) target = $region28
      $region27: #{tpu_custom_call.1} parent=5 // pred_region
        %s119 = ssub.s32 %s11, 1
        %p120 = scmp.lt.s32.totalorder %s16, 1
        %s121 = scalar_select %p120, %s16, 1
        %s122 = smul.addr %s121, 4
        %s123 = scalar_lea.vmem %s0, %s122
        %p124 = pneg %p37
        %p125 = pneg %p34
        %p126 = pneg %p58
        %p127 = pneg %p55
        %p128 = pneg %p84
        %p129 = pneg %p81
        %s130 = sand.u32 %s71, 1
        %s131 = scalar_lea.sflag [#allocation3], %s130
        %s132 = sand.u32 %s71, 1
        %s133 = smul.addr %s132, 16
        %s134 = scalar_lea.vmem [#allocation2], %s133
        %p135 = scmp.lt.s32.totalorder %s16, 1
        %s136 = scalar_select %p135, %s16, 1
        %s137 = smul.addr %s136, 4
        %s138 = scalar_lea.vmem %s0, %s137
        %v139 = vld [vmem:[%s138] sm:$0x1]
        %v140 = vmul.f32 %v139, %v139
        %v141 = vld [vmem:[%s138 + $0x1] sm:$0x1]
        %v142 = vmul.f32 %v141, %v141
        %v143 = vadd.f32 %v140, %v142
        %v144 = vld [vmem:[%s138 + $0x2] sm:$0x1]
        %v145 = vmul.f32 %v144, %v144
        %v146 = vadd.f32 %v143, %v145
        %v147 = vlaneseq
        %v148 = vand.u32 %v147, 127
        %s149 = smul.u32 %s16, 128
        %v150 = vstv %s149
        %v151 = vadd.s32 %v150, %v148
        %vm152 = vcmp.lt.s32.totalorder %v151, 200
        %v153 = vsel %vm152, %v146, 1.0
        %v154 = vrsqrt.pop %v153
        %v155 = vmul.f32 %v153, %v154
        %vm156 = vcmp.eq.f32.partialorder %v153, inf
        %v157 = vsel %vm156, %v153, %v155
        %vm158 = vcmp.eq.f32.partialorder %v153, 0.0
        %v159 = vand.u32 %v153, 2147483648
        %v160 = vsel %vm158, %v159, %v157
        %vm161 = vcmp.eq.f32.partialorder %v153, 0.0
        %v162 = vrsqrt.pop %v153
        %v163 = vsel %vm161, 1.0, %v162
        %v164 = vld [vmem:[%s1] sm:$0xff]
        %v165 = vld [vmem:[%s1 + $0x8] sm:$0xff]
        %167 = vset.pattern.permute.xlu0 0
        %168 = vperm.xlu0 %167, %v164
        %v169 = vpop.permute.xlu0 %168
        %172 = vset.pattern.permute.xlu0 0
        %173 = vperm.xlu0 %172, %v165
        %v174 = vpop.permute.xlu0 %173
        %v176 = vlaneseq
        %v177 = vshrl.u32 %v176, 7
        %v178 = vsub.s32 0, %v177
        %v179 = vrot.slane %v160, %v178
        %v180 = vmul.f32 %v169, %v179
        %v181 = vmul.f32 %v174, %v179
        %v182 = vand.u32 2147483647, %v180
        %vm183 = vcmp.le.f32.partialorder %v182, 0.7853982
        %vm184 = vcmp.lt.s32.totalorder %v180, 0
        %v185 = vand.u32 %v180, 2139095040
        %v186 = vshrl.u32 %v185, 23
        %v187 = vsub.s32 %v186, 127
        %v188 = vand.u32 2147483647, %v180
        %v189 = vand.u32 %v188, 8388607
        %v190 = vor.u32 %v189, 8388608
        %v191 = vsub.s32 0, %v190
        %v192 = vadd.s32 %v187, 1
        %vm193 = vcmp.gt.s32.totalorder %v192, 0
        %v194 = vsel %vm193, %v192, 0
        %v195 = vshrl.u32 %v194, 5
        %v196 = vand.u32 %v194, 31
        %v197 = vsub.s32 32, %v196
        %v198 = vshrl.u32 683565275, %v197
        %v199 = vshll.u32 683565275, %v196
        %v200 = vshrl.u32 2475754826, %v197
        %v201 = vor.u32 %v199, %v200
        %v202 = vshll.u32 2475754826, %v196
        %v203 = vshrl.u32 2131351028, %v197
        %v204 = vor.u32 %v202, %v203
        %v205 = vshll.u32 2131351028, %v196
        %v206 = vshrl.u32 2102212464, %v197
        %v207 = vor.u32 %v205, %v206
        %v208 = vshll.u32 2102212464, %v196
        %v209 = vshrl.u32 920167782, %v197
        %v210 = vor.u32 %v208, %v209
        %v211 = vshll.u32 920167782, %v196
        %v212 = vshrl.u32 1326507024, %v197
        %v213 = vor.u32 %v211, %v212
        %vm214 = vcmp.lt.s32.totalorder %v195, 1
        %vm215 = vcmp.lt.s32.totalorder %v195, 2
        %vm216 = vcmp.lt.s32.totalorder %v195, 3
        %vm217 = vcmp.lt.s32.totalorder %v195, 4
        %v218 = vsel %vm214, %v198, %v201
        %v219 = vsel %vm217, %v207, 2102212464
        %v220 = vsel %vm216, %v204, %v219
        %v221 = vsel %vm215, %v218, %v220
        %v222 = vsel %vm214, %v201, %v204
        %v223 = vsel %vm217, %v210, 920167782
        %v224 = vsel %vm216, %v207, %v223
        %v225 = vsel %vm215, %v222, %v224
        %v226 = vsel %vm214, %v204, %v207
        %v227 = vsel %vm217, %v213, 1326507024
        %v228 = vsel %vm216, %v210, %v227
        %v229 = vsel %vm215, %v226, %v228
        %v230 = vshll.u32 %v190, 8
        %v231 = vmul.u32.u64.compose %v230, %v229
        %v232 = vextract.low.u32 %v231
        %v233 = vextract.high.u32 %v231
        %v234 = vmul.u32.u64.compose %v230, %v225
        %v235 = vextract.low.u32 %v234
        %v236 = vextract.high.u32 %v234
        %v237 = vmul.u32 %v230, %v221
        %v238 = vadd.s32 %v233, %v235
        %vm239 = vc.u32 %v233, %v235
        %v240 = vadd.s32 %v236, 1
        %v241 = vsel %vm239, %v240, %v236
        %v242 = vadd.s32 %v237, %v241
        %v243 = vadd.s32 %v242, 536870912
        %v244 = vshrl.u32 %v243, 30
        %v245 = vshll.u32 %v244, 30
        %v246 = vsub.s32 %v242, %v245
        %vm247 = vcmp.lt.s32.totalorder %v246, 0
        %v248 = vsub.s32 0, %v246
        %v249 = vsel %vm247, %v248, %v246
        %v250 = vclz %v249
        %v251 = vsub.s32 %v250, 2
        %vm252 = vcmp.gt.s32.totalorder 0, %v251
        %v253 = vsel %vm252, 0, %v251
        %v254 = vsub.s32 32, %v253
        %v255 = vshll.u32 %v246, %v253
        %v256 = vshrl.u32 %v238, %v254
        %v257 = vor.u32 %v255, %v256
        %v258 = vsub.s32 4294967266, %v253
        %v259 = vadd.s32 %v258, 127
        %v260 = vshll.u32 %v259, 23
        %v261 = vor.u32 4788187, %v260
        %v262 = vand.u32 2147483647, %v261
        %v264 = vcvt.s32.f32 %v257
        %v265 = vmul.f32 %v264, %v262
        %v266 = vxor.u32 %v265, 2147483648
        %v267 = vsel %vm184, %v266, %v265
        %v268 = vsub.s32 4, %v244
        %v269 = vsel %vm184, %v268, %v244
        %v270 = vsel %vm183, %v180, %v267
        %v271 = vsel %vm183, 0, %v269
        %v272 = vcosq.f32.pop %v270
        %v273 = vsinq.f32.pop %v270
        %vm274 = vweird.f32 %v180
        %v275 = vadd.s32 %v271, 3
        %v276 = vand.u32 %v275, 3
        %vm277 = vcmp.lt.s32.totalorder %v276, 2
        %vm278 = vcmp.eq.s32.totalorder %v276, 0
        %v279 = vxor.u32 %v273, 2147483648
        %v280 = vsel %vm278, %v272, %v279
        %vm281 = vcmp.eq.s32.totalorder %v276, 2
        %v282 = vxor.u32 %v272, 2147483648
        %v283 = vsel %vm281, %v282, %v273
        %v284 = vsel %vm277, %v280, %v283
        %v285 = vsel %vm274, nan, %v284
        %v286 = vand.u32 2147483647, %v181
        %vm287 = vcmp.le.f32.partialorder %v286, 0.7853982
        %vm288 = vcmp.lt.s32.totalorder %v181, 0
        %v289 = vand.u32 %v181, 2139095040
        %v290 = vshrl.u32 %v289, 23
        %v291 = vsub.s32 %v290, 127
        %v292 = vand.u32 2147483647, %v181
        %v293 = vand.u32 %v292, 8388607
        %v294 = vor.u32 %v293, 8388608
        %v295 = vsub.s32 0, %v294
        %v296 = vadd.s32 %v291, 1
        %vm297 = vcmp.gt.s32.totalorder %v296, 0
        %v298 = vsel %vm297, %v296, 0
        %v299 = vshrl.u32 %v298, 5
        %v300 = vand.u32 %v298, 31
        %v301 = vsub.s32 32, %v300
        %v302 = vshrl.u32 683565275, %v301
        %v303 = vshll.u32 683565275, %v300
        %v304 = vshrl.u32 2475754826, %v301
        %v305 = vor.u32 %v303, %v304
        %v306 = vshll.u32 2475754826, %v300
        %v307 = vshrl.u32 2131351028, %v301
        %v308 = vor.u32 %v306, %v307
        %v309 = vshll.u32 2131351028, %v300
        %v310 = vshrl.u32 2102212464, %v301
        %v311 = vor.u32 %v309, %v310
        %v312 = vshll.u32 2102212464, %v300
        %v313 = vshrl.u32 920167782, %v301
        %v314 = vor.u32 %v312, %v313
        %v315 = vshll.u32 920167782, %v300
        %v316 = vshrl.u32 1326507024, %v301
        %v317 = vor.u32 %v315, %v316
        %vm318 = vcmp.lt.s32.totalorder %v299, 1
        %vm319 = vcmp.lt.s32.totalorder %v299, 2
        %vm320 = vcmp.lt.s32.totalorder %v299, 3
        %vm321 = vcmp.lt.s32.totalorder %v299, 4
        %v322 = vsel %vm318, %v302, %v305
        %v323 = vsel %vm321, %v311, 2102212464
        %v324 = vsel %vm320, %v308, %v323
        %v325 = vsel %vm319, %v322, %v324
        %v326 = vsel %vm318, %v305, %v308
        %v327 = vsel %vm321, %v314, 920167782
        %v328 = vsel %vm320, %v311, %v327
        %v329 = vsel %vm319, %v326, %v328
        %v330 = vsel %vm318, %v308, %v311
        %v331 = vsel %vm321, %v317, 1326507024
        %v332 = vsel %vm320, %v314, %v331
        %v333 = vsel %vm319, %v330, %v332
        %v334 = vshll.u32 %v294, 8
        %v335 = vmul.u32.u64.compose %v334, %v333
        %v336 = vextract.low.u32 %v335
        %v337 = vextract.high.u32 %v335
        %v338 = vmul.u32.u64.compose %v334, %v329
        %v339 = vextract.low.u32 %v338
        %v340 = vextract.high.u32 %v338
        %v341 = vmul.u32 %v334, %v325
        %v342 = vadd.s32 %v337, %v339
        %vm343 = vc.u32 %v337, %v339
        %v344 = vadd.s32 %v340, 1
        %v345 = vsel %vm343, %v344, %v340
        %v346 = vadd.s32 %v341, %v345
        %v347 = vadd.s32 %v346, 536870912
        %v348 = vshrl.u32 %v347, 30
        %v349 = vshll.u32 %v348, 30
        %v350 = vsub.s32 %v346, %v349
        %vm351 = vcmp.lt.s32.totalorder %v350, 0
        %v352 = vsub.s32 0, %v350
        %v353 = vsel %vm351, %v352, %v350
        %v354 = vclz %v353
        %v355 = vsub.s32 %v354, 2
        %vm356 = vcmp.gt.s32.totalorder 0, %v355
        %v357 = vsel %vm356, 0, %v355
        %v358 = vsub.s32 32, %v357
        %v359 = vshll.u32 %v350, %v357
        %v360 = vshrl.u32 %v342, %v358
        %v361 = vor.u32 %v359, %v360
        %v362 = vsub.s32 4294967266, %v357
        %v363 = vadd.s32 %v362, 127
        %v364 = vshll.u32 %v363, 23
        %v365 = vor.u32 4788187, %v364
        %v366 = vand.u32 2147483647, %v365
        %v368 = vcvt.s32.f32 %v361
        %v369 = vmul.f32 %v368, %v366
        %v370 = vxor.u32 %v369, 2147483648
        %v371 = vsel %vm288, %v370, %v369
        %v372 = vsub.s32 4, %v348
        %v373 = vsel %vm288, %v372, %v348
        %v374 = vsel %vm287, %v181, %v371
        %v375 = vsel %vm287, 0, %v373
        %v376 = vcosq.f32.pop %v374
        %v377 = vsinq.f32.pop %v374
        %vm378 = vweird.f32 %v181
        %v379 = vadd.s32 %v375, 3
        %v380 = vand.u32 %v379, 3
        %vm381 = vcmp.lt.s32.totalorder %v380, 2
        %vm382 = vcmp.eq.s32.totalorder %v380, 0
        %v383 = vxor.u32 %v377, 2147483648
        %v384 = vsel %vm382, %v376, %v383
        %vm385 = vcmp.eq.s32.totalorder %v380, 2
        %v386 = vxor.u32 %v376, 2147483648
        %v387 = vsel %vm385, %v386, %v377
        %v388 = vsel %vm381, %v384, %v387
        %v389 = vsel %vm378, nan, %v388
        %v390 = vlaneseq
        %v391 = vshrl.u32 %v390, 7
        %v392 = vsub.s32 0, %v391
        %v393 = vrot.slane %v163, %v392
        %v394 = vmul.f32 %v285, %v393
        %v395 = vmul.f32 %v389, %v393
        %396 = vst [vmem:[%s134] sm:$0xff] %v394
        %397 = vst [vmem:[%s134 + $0x8] sm:$0xff] %v395
        %s398 = sand.u32 %s71, 1
        %s399 = scalar_lea.sflag [#allocation3], %s398
        %s400 = sand.u32 %s71, 1
        %s401 = smul.addr %s400, 16
        %s402 = scalar_lea.vmem [#allocation2], %s401
        // Predicated region
        $region29: #{tpu_custom_call.1} parent=27 // pred_check
          %p403 = pneg %p81
        $region30: #{tpu_custom_call.1} parent=27 // pred_check_branch
          %405 = sbr.rel (%p403) target = $region32
        $region31: #{tpu_custom_call.1} parent=27 // pred_region
          %s407 = ssub.s32 256, 256
          %408 = vsyncadd %s399, %s407
          %s409 = smul.addr %s16, 128
          %s410 = scalar_lea.hbm %s2, %s409
          %s411 = sshll.u32 %s402, 4
          %s412 = int_to_ptr.vmem [resolvable:$true] %s411
          %417 = dma.vmem_to_hbm [thread:$0]  %s412, 256, %s410, %s399, 128, 256, 8
        $region32: #{tpu_custom_call.1} parent=27 // pred_fallthru
          _
      $region28: #{tpu_custom_call.1} parent=5 // pred_fallthru
        _
      %p418 = scmp.le.s32.totalorder 2, %s11
      // Predicated region
      $region33: #{tpu_custom_call.1} parent=5 // pred_check
        %p419 = pneg %p418
      $region34: #{tpu_custom_call.1} parent=5 // pred_check_branch
        %421 = sbr.rel (%p419) target = $region36
      $region35: #{tpu_custom_call.1} parent=5 // pred_region
        %s422 = ssub.s32 %s11, 2
        // Predicated region
        $region37: #{tpu_custom_call.1} parent=35 // pred_check
          %p423 = pneg %p87
        $region38: #{tpu_custom_call.1} parent=35 // pred_check_branch
          %425 = sbr.rel (%p423) target = $region40
        $region39: #{tpu_custom_call.1} parent=35 // pred_region
          %s426 = sand.u32 %s72, 1
          %s427 = scalar_lea.sflag [#allocation3], %s426
          %s428 = sand.u32 %s72, 1
          %s429 = smul.addr %s428, 16
          %s430 = scalar_lea.vmem [#allocation2], %s429
          %431 = dma.done %s427, 256
        $region40: #{tpu_custom_call.1} parent=35 // pred_fallthru
          _
      $region36: #{tpu_custom_call.1} parent=5 // pred_fallthru
        _
    $region6: #{tpu_custom_call.1} parent=1 // loop_footer
      %s15 = sadd.s32 1, %s11
    $region7: #{tpu_custom_call.1} parent=1 // loop_footer_branch
      %10 = sbr.rel target = $region3
    $region8: #{tpu_custom_call.1} parent=1 // loop_exit
      _
    %432 = vsyncpa [#allocation3], 1
    %s433 = scalar_lea.sflag [#allocation3], 1
    %434 = vsyncpa %s433, 1

</llo_original>
